<compile_context>
chip_gen: v5e
topology: v5e:2x2
jax: 0.10.0
libtpu: 0.0.40
codegen_flags: <defaults>
</compile_context>

<pallas_src>
import jax
import jax.numpy as jnp
from jax.experimental import pallas as pl
from jax.experimental.pallas import tpu as pltpu


_F = 4                      # in_features of nn.Linear(4, 1)
_PACK = 128 // _F           # 32 batch samples packed per 128-lane row
_ROWS_PER_TILE = 8192       # rows of packed x per grid step (= 256K samples)


def _neuron_kernel(x_ref, s_ref, b_ref, o_ref):
    # x_ref: (TR, 128) VMEM   packed x  (32 samples x 4 features per row)
    # s_ref: (128, 32) VMEM   weight-scatter matrix
    # b_ref: (1,)      SMEM   bias
    # o_ref: (TR, 32)  VMEM   32 outputs per packed row
    x = x_ref[...].astype(jnp.float32)                  # cast after the load
    acc = jnp.dot(x, s_ref[...], preferred_element_type=jnp.float32)
    o_ref[...] = (acc + b_ref[0]).astype(o_ref.dtype)


def neuron_forward(x, weight, bias):
    """Pallas equivalent of `nn.Linear(4, 1)(x)`.

    x:      (B, 4)  float32 or bf16
    weight: (1, 4)  (out_features, in_features) -- torch layout
    bias:   (1,)
    returns (B, 1)  in x.dtype
    """
    B, F = x.shape
    assert F == _F and weight.size == _F and bias.size == 1
    out_dtype = x.dtype

    # Weight-scatter matrix S[l, o] = w[l % 4] * (o == l // 4), shape (128, 32).
    w = weight.reshape(_F).astype(jnp.float32)
    lanes = jnp.arange(_PACK * _F)                                   # 128
    scatter = (lanes[:, None] // _F) == jnp.arange(_PACK)[None, :]   # (128, 32)
    s_mat = jnp.where(scatter, w[lanes % _F][:, None], 0.0).astype(jnp.float32)
    b = bias.reshape(1).astype(jnp.float32)

    # Pad batch to a multiple of 32 only if needed (padded rows produce `bias`
    # and are sliced off); then reshape x for free to (R, 128).
    pad = (-B) % _PACK
    x_p = jnp.pad(x, ((0, pad), (0, 0))) if pad else x
    bp = B + pad
    r = bp // _PACK
    x2 = x_p.reshape(r, _PACK * _F)          # contiguous -> no data movement

    tr = r if r <= _ROWS_PER_TILE else _ROWS_PER_TILE
    grid = (pl.cdiv(r, tr),)

    out2 = pl.pallas_call(
        _neuron_kernel,
        out_shape=jax.ShapeDtypeStruct((r, _PACK), out_dtype),
        grid_spec=pltpu.PrefetchScalarGridSpec(
            num_scalar_prefetch=0,
            grid=grid,
            in_specs=[
                pl.BlockSpec((tr, _PACK * _F), lambda i: (i, 0)),       # x tile
                pl.BlockSpec((_PACK * _F, _PACK), lambda i: (0, 0)),    # S (resident)
                pl.BlockSpec(memory_space=pltpu.MemorySpace.SMEM),      # bias
            ],
            out_specs=pl.BlockSpec((tr, _PACK), lambda i: (i, 0)),
        ),
        compiler_params=pltpu.CompilerParams(
            dimension_semantics=("parallel",),
            vmem_limit_bytes=48 * 1024 * 1024,   # ~16 MiB real use; v7x-safe cap
        ),
    )(x2, s_mat, b)

    out = out2.reshape(bp, 1)
    return out[:B] if pad else out


if __name__ == "__main__":
    key = jax.random.PRNGKey(0)
    kx, kw, kb = jax.random.split(key, 3)

    # Small shapes consistent with the module: batch=8, in_features=4.
    B, F = 8, 4
    x = jax.random.normal(kx, (B, F), dtype=jnp.float32)

    # Parameter init mimicking torch's default U(-1/sqrt(fan_in), 1/sqrt(fan_in)).
    bound = 1.0 / jnp.sqrt(jnp.float32(F))
    weight = jax.random.uniform(kw, (1, F), minval=-bound, maxval=bound,
                                dtype=jnp.float32)
    bias = jax.random.uniform(kb, (1,), minval=-bound, maxval=bound,
                              dtype=jnp.float32)

    out = neuron_forward(x, weight, bias)
    out = jax.block_until_ready(out)

    ref = x @ weight.T + bias
    assert out.shape == (B, 1)
    assert jnp.allclose(out, ref, atol=1e-5, rtol=1e-5)

    # Also exercise the tiled path: grid > 1, partial last block, non-multiple
    # of 32 batch (padding path).
    B_big = _ROWS_PER_TILE * _PACK + 5 * _PACK * 37 + 13
    x_big = jax.random.normal(kx, (B_big, F), dtype=jnp.float32)
    out_big = jax.block_until_ready(neuron_forward(x_big, weight, bias))
    ref_big = x_big @ weight.T + bias
    assert out_big.shape == (B_big, 1)
    assert jnp.allclose(out_big, ref_big, atol=1e-5, rtol=1e-5)

    print("KERNEL_OK")
</pallas_src>

<mosaic_0001>
module attributes {stable_mosaic.version = 11 : i64} {
  func.func @_neuron_kernel(%arg0: i32, %arg1: memref<1x128xf32, #tpu.memory_space<vmem>>, %arg2: memref<128x32xf32, #tpu.memory_space<vmem>>, %arg3: memref<1xf32, #tpu.memory_space<smem>>, %arg4: memref<1x32xf32, #tpu.memory_space<vmem>>) attributes {dimension_semantics = [#tpu.dimension_semantics<parallel>], iteration_bounds = array<i64: 1>, scalar_prefetch = 0 : i64, scratch_operands = 0 : i64, tpu.core_type = #tpu.core_type<tc>, window_params = [{transform_indices = @transform_0, window_bounds = array<i64: 1, 128>}, {pipeline_mode = #tpu.pipeline_mode<synchronous>, transform_indices = @transform_1, window_bounds = array<i64: 128, 32>}, {transform_indices = @transform_2, window_bounds = array<i64: 1>}, {transform_indices = @transform_3, window_bounds = array<i64: 1, 32>}]} {
    %c0 = arith.constant 0 : index
    %c0_0 = arith.constant 0 : index
    %0 = vector.load %arg1[%c0, %c0_0] : memref<1x128xf32, #tpu.memory_space<vmem>>, vector<1x128xf32>
    %c0_1 = arith.constant 0 : index
    %c0_2 = arith.constant 0 : index
    %1 = vector.load %arg2[%c0_1, %c0_2] : memref<128x32xf32, #tpu.memory_space<vmem>>, vector<128x32xf32>
    %cst = arith.constant dense<0.000000e+00> : vector<1x32xf32>
    %2 = tpu.matmul %0, %1, %cst {dimension_numbers = #tpu.dot_dimension_numbers<[1], [0], [0], [1], [0, 0, 1, 1], [], []>} : vector<1x128xf32>, vector<128x32xf32>, vector<1x32xf32> -> vector<1x32xf32>
    %c0_3 = arith.constant 0 : index
    %3 = memref.load %arg3[%c0_3] : memref<1xf32, #tpu.memory_space<smem>>
    %4 = vector.broadcast %3 : f32 to vector<1x32xf32>
    %5 = arith.addf %2, %4 : vector<1x32xf32>
    %c0_4 = arith.constant 0 : index
    %c0_5 = arith.constant 0 : index
    %6 = vector.load %arg4[%c0_4, %c0_5] : memref<1x32xf32, #tpu.memory_space<vmem>>, vector<1x32xf32>
    tpu.vector_store %arg4[%c0_4, %c0_5], %5 {strides = array<i32>} : memref<1x32xf32, #tpu.memory_space<vmem>>, vector<1x32xf32>,
    return
  }
  func.func @transform_0(%arg0: i32) -> (i32, i32) {
    %c0_i32 = arith.constant 0 : i32
    %c0_i32_0 = arith.constant 0 : i32
    return %arg0, %c0_i32 : i32, i32
  }
  func.func @transform_1(%arg0: i32) -> (i32, i32) {
    %c0_i32 = arith.constant 0 : i32
    %c0_i32_0 = arith.constant 0 : i32
    %c0_i32_1 = arith.constant 0 : i32
    return %c0_i32, %c0_i32_0 : i32, i32
  }
  func.func @transform_2(%arg0: i32) -> i32 {
    %c0_i32 = arith.constant 0 : i32
    %c0_i32_0 = arith.constant 0 : i32
    return %c0_i32 : i32
  }
  func.func @transform_3(%arg0: i32) -> (i32, i32) {
    %c0_i32 = arith.constant 0 : i32
    %c0_i32_0 = arith.constant 0 : i32
    return %arg0, %c0_i32 : i32, i32
  }
}

</mosaic_0001>

<llo_original>
// kernel: tpu_custom_call.1
$region0: #{tpu_custom_call.1}
  #allocation0 [shape = 'u32[]', space=smem, size = 0x4, offset = 0x4, fixed_abs, tag = 'smem constant byte address 0x4 - core index']
  #allocation1 [shape = 'u32[72,128]{1,0:T(1,128)}', space=vmem, size = 0x9000, scoped, tag = 'internal scratch']
  #allocation2 [shape = 'f32[1]{0:T(128)S(6)}', space=smem, size = 0x200, scoped, tag = 'scoped memory for tpu_custom_call.1']
  %s0 = inlined_call_operand.vmem [shape: f32[1,128], index: 0, kind: input, shape index: {}]
  %s1 = inlined_call_operand.vmem [shape: f32[128,32], index: 1, kind: input, shape index: {}]
  %s2 = inlined_call_operand.<no memory space> [shape: f32[1], index: 2, kind: input, shape index: {}]
  %s3 = inlined_call_operand.hbm [shape: f32[1,32], index: 3, kind: output, shape index: {}]
  %s4 = sld [smem:[#allocation0]]
  $region22: #{tpu_custom_call.1} parent=0
    _
  %s6 = ssub.s32 1, %s4
  %s7 = scalar_select 0, %s6, %s4
  %8 = sst [smem:[#allocation2]] %s2
  $region1: #{tpu_custom_call.1} parent=0
    #allocation3 [shape = 'u8[512]{0}', space=vmem, size = 0x400, scoped, tag = 'output window, operand 0, single buffered']
    #allocation4 [shape = 's32[1]{0}', space=sflag, size = 0x4, scoped, tag = 'scoped memory for tpu_custom_call.1']
    %9 = vsyncpa [#allocation4], 0
    // Predicated region
    $region2: #{tpu_custom_call.1} parent=1 // pred_check
      _
    $region3: #{tpu_custom_call.1} parent=1 // pred_check_branch
      %11 = sbr.rel (0) target = $region5
    $region4: #{tpu_custom_call.1} parent=1 // pred_region
      _
    $region5: #{tpu_custom_call.1} parent=1 // pred_fallthru
      _
    // Predicated region
    $region6: #{tpu_custom_call.1} parent=1 // pred_check
      _
    $region7: #{tpu_custom_call.1} parent=1 // pred_check_branch
      %13 = sbr.rel (0) target = $region9
    $region8: #{tpu_custom_call.1} parent=1 // pred_region
      _
    $region9: #{tpu_custom_call.1} parent=1 // pred_fallthru
      _
    // Predicated region
    $region10: #{tpu_custom_call.1} parent=1 // pred_check
      _
    $region11: #{tpu_custom_call.1} parent=1 // pred_check_branch
      %15 = sbr.rel (0) target = $region13
    $region12: #{tpu_custom_call.1} parent=1 // pred_region
      _
    $region13: #{tpu_custom_call.1} parent=1 // pred_fallthru
      _
    %v16 = vld [vmem:[%s0] sm:$0x1]
    %v17 = vld [vmem:[%s1] sm:$0xff]
    %v18 = vld [vmem:[%s1 + $0x8] sm:$0xff]
    %v19 = vld [vmem:[%s1 + $0x10] sm:$0xff]
    %v20 = vld [vmem:[%s1 + $0x18] sm:$0xff]
    %v21 = vld [vmem:[%s1 + $0x20] sm:$0xff]
    %v22 = vld [vmem:[%s1 + $0x28] sm:$0xff]
    %v23 = vld [vmem:[%s1 + $0x30] sm:$0xff]
    %v24 = vld [vmem:[%s1 + $0x38] sm:$0xff]
    %v25 = vld [vmem:[%s1 + $0x40] sm:$0xff]
    %v26 = vld [vmem:[%s1 + $0x48] sm:$0xff]
    %v27 = vld [vmem:[%s1 + $0x50] sm:$0xff]
    %v28 = vld [vmem:[%s1 + $0x58] sm:$0xff]
    %v29 = vld [vmem:[%s1 + $0x60] sm:$0xff]
    %v30 = vld [vmem:[%s1 + $0x68] sm:$0xff]
    %v31 = vld [vmem:[%s1 + $0x70] sm:$0xff]
    %v32 = vld [vmem:[%s1 + $0x78] sm:$0xff]
    %s33 = sld [smem:[#allocation2]]
    %v34 = vstv %s33
    %35 = vmatpush.msra.mxu0 %v32
    %36 = vmatpush.msra.mxu0 %v31
    %37 = vmatpush.msra.mxu0 %v30
    %38 = vmatpush.msra.mxu0 %v29
    %39 = vmatpush.msra.mxu0 %v28
    %40 = vmatpush.msra.mxu0 %v27
    %41 = vmatpush.msra.mxu0 %v26
    %42 = vmatpush.msra.mxu0 %v25
    %43 = vmatpush.msra.mxu0 %v24
    %44 = vmatpush.msra.mxu0 %v23
    %45 = vmatpush.msra.mxu0 %v22
    %46 = vmatpush.msra.mxu0 %v21
    %47 = vmatpush.msra.mxu0 %v20
    %48 = vmatpush.msra.mxu0 %v19
    %49 = vmatpush.msra.mxu0 %v18
    %50 = vmatpush.msra.mxu0 %v17
    %51 = vmatmul.f32.gmra.mxu0 %v16
    %v52 = vpop.f32.mrf.mxu0
    %v53 = vadd.f32 %v34, %v52
    %54 = vdwg.mxu0
    %vm55 = vcmask 253952
    %56 = vst.msk [vmem:[#allocation3] sm:$0x1] %vm55, %v53
    // Predicated region
    $region14: #{tpu_custom_call.1} parent=1 // pred_check
      _
    $region15: #{tpu_custom_call.1} parent=1 // pred_check_branch
      %58 = sbr.rel (0) target = $region17
    $region16: #{tpu_custom_call.1} parent=1 // pred_region
      %60 = vsyncadd [#allocation4], 0
      %s62 = sshll.u32 [#allocation3], 4
      %s63 = int_to_ptr.vmem [resolvable:$true] %s62
      %s64 = sshll.u32 %s3, 4
      %s65 = int_to_ptr.hbm [resolvable:$true] %s64
      %67 = dma.vmem_to_hbm [thread:$0]  %s63, 16, %s65, [#allocation4]
    $region17: #{tpu_custom_call.1} parent=1 // pred_fallthru
      _
    // Predicated region
    $region18: #{tpu_custom_call.1} parent=1 // pred_check
      _
    $region19: #{tpu_custom_call.1} parent=1 // pred_check_branch
      %69 = sbr.rel (0) target = $region21
    $region20: #{tpu_custom_call.1} parent=1 // pred_region
      %71 = dma.done [#allocation4], 16
    $region21: #{tpu_custom_call.1} parent=1 // pred_fallthru
      _
    %72 = vsyncpa [#allocation4], 1

</llo_original>
